<compile_context>
chip_gen: v7x
topology: tpu7x:2x2x1
jax: 0.10.0
libtpu: 0.0.40
codegen_flags: <defaults>
</compile_context>

<pallas_src>
import functools

import jax
import jax.numpy as jnp
from jax.experimental import pallas as pl
from jax.experimental.pallas import tpu as pltpu


def _round_up(x: int, m: int) -> int:
    return (x + m - 1) // m * m


def _mlp_fused_kernel(x_ref, w1_ref, b1_ref, w2_ref, b2_ref, o_ref):
    # x: (tm, Kp), w1: (Kp, Hp), b1: (1, Hp), w2: (Hp, Cp), b2: (1, Cp)
    # Layer 1: MXU matmul with f32 accumulation, bias + ReLU on the VPU.
    h = jnp.dot(x_ref[...].astype(w1_ref.dtype), w1_ref[...],
                preferred_element_type=jnp.float32)
    h = jnp.maximum(h + b1_ref[...], 0.0)
    # Layer 2: activation stays on-chip (VMEM/vregs), straight into the MXU.
    y = jnp.dot(h.astype(w2_ref.dtype), w2_ref[...],
                preferred_element_type=jnp.float32)
    o_ref[...] = (y + b2_ref[...]).astype(o_ref.dtype)


def mlp_classifier_forward(x_nchw, params, *, use_bf16_weights: bool = False,
                           tm_max: int = 512):
    """Forward pass of MLPClassifier: flatten -> Linear -> ReLU -> Linear.

    params = [(W1, b1), (W2, b2)] with weights stored as (in_dim, out_dim).
    """
    (w1, b1), (w2, b2) = params
    bsz = x_nchw.shape[0]

    # nn.Flatten() on NCHW: row-major flatten of the (3, H, W) trailing dims.
    # Contiguous reshape; XLA fuses it into the padding copy below.
    x = x_nchw.reshape(bsz, -1).astype(jnp.float32)
    M, K = x.shape
    K2, H = w1.shape
    H2, C = w2.shape
    assert K == K2 and H == H2

    # Pad to lane/sublane-dense tiles.
    k_pad = _round_up(K, 128)
    h_pad = _round_up(H, 128)
    c_pad = _round_up(C, 128)
    tm = min(tm_max, _round_up(M, 8))      # batch tile (multiple of 8 sublanes)
    m_pad = _round_up(M, tm)

    w_dtype = jnp.bfloat16 if use_bf16_weights else jnp.float32

    xp = jnp.zeros((m_pad, k_pad), jnp.float32).at[:M, :K].set(x)
    w1p = jnp.zeros((k_pad, h_pad), w_dtype).at[:K, :H].set(w1.astype(w_dtype))
    b1p = jnp.zeros((1, h_pad), jnp.float32).at[0, :H].set(b1)
    w2p = jnp.zeros((h_pad, c_pad), w_dtype).at[:H, :C].set(w2.astype(w_dtype))
    b2p = jnp.zeros((1, c_pad), jnp.float32).at[0, :C].set(b2)

    grid = (m_pad // tm,)

    out_padded = pl.pallas_call(
        _mlp_fused_kernel,
        out_shape=jax.ShapeDtypeStruct((m_pad, c_pad), jnp.float32),
        grid_spec=pltpu.PrefetchScalarGridSpec(
            num_scalar_prefetch=0,
            grid=grid,
            in_specs=[
                pl.BlockSpec((tm, k_pad), lambda i: (i, 0)),      # x tile
                pl.BlockSpec((k_pad, h_pad), lambda i: (0, 0)),   # W1 (resident)
                pl.BlockSpec((1, h_pad), lambda i: (0, 0)),       # b1
                pl.BlockSpec((h_pad, c_pad), lambda i: (0, 0)),   # W2 (resident)
                pl.BlockSpec((1, c_pad), lambda i: (0, 0)),       # b2
            ],
            out_specs=pl.BlockSpec((tm, c_pad), lambda i: (i, 0)),
        ),
        compiler_params=pltpu.CompilerParams(
            # Batch tiles are independent -> shard across TensorCores on v7x.
            dimension_semantics=("parallel",),
        ),
    )(xp, w1p, b1p, w2p, b2p)

    # Strip the padding back off.
    return out_padded[:M, :C]


def init_params(key, h, w, num_classes, hidden_dim):
    """Deterministic synthetic parameters (weights stored as (in, out)),
    matching torch.nn.Linear's default uniform(-1/sqrt(fan_in), 1/sqrt(fan_in))."""
    params = []
    dims = [h * w * 3, hidden_dim, num_classes]
    for i in range(len(dims) - 1):
        key, kw, kb = jax.random.split(key, 3)
        bound = 1.0 / jnp.sqrt(dims[i])
        W = jax.random.uniform(kw, (dims[i], dims[i + 1]),
                               minval=-bound, maxval=bound, dtype=jnp.float32)
        B = jax.random.uniform(kb, (dims[i + 1],),
                               minval=-bound, maxval=bound, dtype=jnp.float32)
        params.append((W, B))
    return params


if __name__ == "__main__":
    # Small shapes consistent with the module's forward.
    batch = 2
    H = W = 16
    num_classes = 6
    hidden_dim = 32

    key = jax.random.PRNGKey(0)
    key, kx = jax.random.split(key)
    x = jax.random.normal(kx, (batch, 3, H, W), dtype=jnp.float32)

    params = init_params(key, H, W, num_classes, hidden_dim)

    logits = mlp_classifier_forward(x, params)
    logits = jax.block_until_ready(logits)
    assert logits.shape == (batch, num_classes)
    assert logits.dtype == jnp.float32

    # Cross-check against a plain-JAX reference of the same math.
    (W1, B1), (W2, B2) = params
    ref = x.reshape(batch, -1)
    ref = jnp.maximum(ref @ W1 + B1, 0.0)
    ref = ref @ W2 + B2
    assert jnp.allclose(logits, ref, atol=1e-4, rtol=1e-4)

    print("KERNEL_OK")
</pallas_src>

<mosaic_0001>
module attributes {stable_mosaic.version = 11 : i64} {
  func.func @_mlp_fused_kernel(%arg0: i32, %arg1: memref<8x768xf32, #tpu.memory_space<vmem>>, %arg2: memref<768x128xf32, #tpu.memory_space<vmem>>, %arg3: memref<1x128xf32, #tpu.memory_space<vmem>>, %arg4: memref<128x128xf32, #tpu.memory_space<vmem>>, %arg5: memref<1x128xf32, #tpu.memory_space<vmem>>, %arg6: memref<8x128xf32, #tpu.memory_space<vmem>>) attributes {dimension_semantics = [#tpu.dimension_semantics<parallel>], iteration_bounds = array<i64: 1>, scalar_prefetch = 0 : i64, scratch_operands = 0 : i64, tpu.core_type = #tpu.core_type<tc>, window_params = [{transform_indices = @transform_0, window_bounds = array<i64: 8, 768>}, {pipeline_mode = #tpu.pipeline_mode<synchronous>, transform_indices = @transform_1, window_bounds = array<i64: 768, 128>}, {pipeline_mode = #tpu.pipeline_mode<synchronous>, transform_indices = @transform_2, window_bounds = array<i64: 1, 128>}, {pipeline_mode = #tpu.pipeline_mode<synchronous>, transform_indices = @transform_3, window_bounds = array<i64: 128, 128>}, {pipeline_mode = #tpu.pipeline_mode<synchronous>, transform_indices = @transform_4, window_bounds = array<i64: 1, 128>}, {transform_indices = @transform_5, window_bounds = array<i64: 8, 128>}]} {
    %c0 = arith.constant 0 : index
    %c0_0 = arith.constant 0 : index
    %0 = vector.load %arg1[%c0, %c0_0] : memref<8x768xf32, #tpu.memory_space<vmem>>, vector<8x768xf32>
    %c0_1 = arith.constant 0 : index
    %c0_2 = arith.constant 0 : index
    %1 = vector.load %arg2[%c0_1, %c0_2] : memref<768x128xf32, #tpu.memory_space<vmem>>, vector<768x128xf32>
    %cst = arith.constant dense<0.000000e+00> : vector<8x128xf32>
    %2 = tpu.matmul %0, %1, %cst {dimension_numbers = #tpu.dot_dimension_numbers<[1], [0], [0], [1], [0, 0, 1, 1], [], []>} : vector<8x768xf32>, vector<768x128xf32>, vector<8x128xf32> -> vector<8x128xf32>
    %c0_3 = arith.constant 0 : index
    %c0_4 = arith.constant 0 : index
    %3 = vector.load %arg3[%c0_3, %c0_4] : memref<1x128xf32, #tpu.memory_space<vmem>>, vector<1x128xf32>
    %4 = vector.broadcast %3 : vector<1x128xf32> to vector<8x128xf32>
    %5 = arith.addf %2, %4 : vector<8x128xf32>
    %cst_5 = arith.constant 0.000000e+00 : f32
    %6 = vector.broadcast %cst_5 : f32 to vector<8x128xf32>
    %7 = arith.maximumf %5, %6 : vector<8x128xf32>
    %c0_6 = arith.constant 0 : index
    %c0_7 = arith.constant 0 : index
    %8 = vector.load %arg4[%c0_6, %c0_7] : memref<128x128xf32, #tpu.memory_space<vmem>>, vector<128x128xf32>
    %cst_8 = arith.constant dense<0.000000e+00> : vector<8x128xf32>
    %9 = tpu.matmul %7, %8, %cst_8 {dimension_numbers = #tpu.dot_dimension_numbers<[1], [0], [0], [1], [0, 0, 1, 1], [], []>} : vector<8x128xf32>, vector<128x128xf32>, vector<8x128xf32> -> vector<8x128xf32>
    %c0_9 = arith.constant 0 : index
    %c0_10 = arith.constant 0 : index
    %10 = vector.load %arg5[%c0_9, %c0_10] : memref<1x128xf32, #tpu.memory_space<vmem>>, vector<1x128xf32>
    %11 = vector.broadcast %10 : vector<1x128xf32> to vector<8x128xf32>
    %12 = arith.addf %9, %11 : vector<8x128xf32>
    %c0_11 = arith.constant 0 : index
    %c0_12 = arith.constant 0 : index
    %13 = vector.load %arg6[%c0_11, %c0_12] : memref<8x128xf32, #tpu.memory_space<vmem>>, vector<8x128xf32>
    tpu.vector_store %arg6[%c0_11, %c0_12], %12 {strides = array<i32>} : memref<8x128xf32, #tpu.memory_space<vmem>>, vector<8x128xf32>,
    return
  }
  func.func @transform_0(%arg0: i32) -> (i32, i32) {
    %c0_i32 = arith.constant 0 : i32
    %c0_i32_0 = arith.constant 0 : i32
    return %arg0, %c0_i32 : i32, i32
  }
  func.func @transform_1(%arg0: i32) -> (i32, i32) {
    %c0_i32 = arith.constant 0 : i32
    %c0_i32_0 = arith.constant 0 : i32
    %c0_i32_1 = arith.constant 0 : i32
    return %c0_i32, %c0_i32_0 : i32, i32
  }
  func.func @transform_2(%arg0: i32) -> (i32, i32) {
    %c0_i32 = arith.constant 0 : i32
    %c0_i32_0 = arith.constant 0 : i32
    %c0_i32_1 = arith.constant 0 : i32
    return %c0_i32, %c0_i32_0 : i32, i32
  }
  func.func @transform_3(%arg0: i32) -> (i32, i32) {
    %c0_i32 = arith.constant 0 : i32
    %c0_i32_0 = arith.constant 0 : i32
    %c0_i32_1 = arith.constant 0 : i32
    return %c0_i32, %c0_i32_0 : i32, i32
  }
  func.func @transform_4(%arg0: i32) -> (i32, i32) {
    %c0_i32 = arith.constant 0 : i32
    %c0_i32_0 = arith.constant 0 : i32
    %c0_i32_1 = arith.constant 0 : i32
    return %c0_i32, %c0_i32_0 : i32, i32
  }
  func.func @transform_5(%arg0: i32) -> (i32, i32) {
    %c0_i32 = arith.constant 0 : i32
    %c0_i32_0 = arith.constant 0 : i32
    return %arg0, %c0_i32 : i32, i32
  }
}

</mosaic_0001>

<llo_original>
// kernel: tpu_custom_call.1
$region0: #{tpu_custom_call.1}
  #allocation0 [shape = 'u32[]', space=smem, size = 0x4, offset = 0x4, fixed_abs, tag = 'smem constant byte address 0x4 - core index']
  #allocation1 [shape = 'u32[144,128]{1,0:T(1,128)}', space=vmem, size = 0x12000, scoped, tag = 'internal scratch']
  %s0 = inlined_call_operand.hbm [shape: f32[8,768], index: 0, kind: input, shape index: {}]
  %s1 = inlined_call_operand.hbm [shape: f32[768,128], index: 1, kind: input, shape index: {}]
  %s2 = inlined_call_operand.vmem [shape: f32[1,128], index: 2, kind: input, shape index: {}]
  %s3 = inlined_call_operand.hbm [shape: f32[128,128], index: 3, kind: input, shape index: {}]
  %s4 = inlined_call_operand.vmem [shape: f32[1,128], index: 4, kind: input, shape index: {}]
  %s5 = inlined_call_operand.hbm [shape: f32[8,128], index: 5, kind: output, shape index: {}]
  %s6 = sld [smem:[#allocation0]]
  $region42: #{tpu_custom_call.1} parent=0
    _
  %s8 = ssub.s32 1, %s6
  %s9 = scalar_select 0, %s8, %s6
  $region1: #{tpu_custom_call.1} parent=0
    #allocation2 [shape = 'u8[24576]{0}', space=vmem, size = 0x6000, scoped, tag = 'input window, operand 0, single buffered']
    #allocation3 [shape = 's32[1]{0}', space=sflag, size = 0x4, scoped, tag = 'scoped memory for tpu_custom_call.1']
    #allocation4 [shape = 's32[1]{0}', space=sflag, size = 0x4, scoped, tag = 'scoped memory for tpu_custom_call.1']
    #allocation5 [shape = 'u8[393216]{0}', space=vmem, size = 0x60000, scoped, tag = 'input window, operand 1, single buffered']
    #allocation6 [shape = 's32[1]{0}', space=sflag, size = 0x4, scoped, tag = 'scoped memory for tpu_custom_call.1']
    #allocation7 [shape = 'u8[65536]{0}', space=vmem, size = 0x10000, scoped, tag = 'input window, operand 3, single buffered']
    #allocation8 [shape = 'u8[4096]{0}', space=vmem, size = 0x1000, scoped, tag = 'output window, operand 0, single buffered']
    %10 = vsyncpa [#allocation3], 0
    %11 = vsyncpa [#allocation6], 0
    %12 = vsyncpa [#allocation4], 0
    // Predicated region
    $region2: #{tpu_custom_call.1} parent=1 // pred_check
      _
    $region3: #{tpu_custom_call.1} parent=1 // pred_check_branch
      %14 = sbr.rel (0) target = $region5
    $region4: #{tpu_custom_call.1} parent=1 // pred_region
      %s16 = ssub.s32 768, 768
      %17 = vsyncadd [#allocation3], %s16
      %s19 = sshll.u32 [#allocation2], 4
      %s20 = int_to_ptr.vmem [resolvable:$true] %s19
      %22 = dma.hbm_to_vmem [thread:$0]  %s0, 768, %s20, [#allocation3]
    $region5: #{tpu_custom_call.1} parent=1 // pred_fallthru
      _
    // Predicated region
    $region6: #{tpu_custom_call.1} parent=1 // pred_check
      _
    $region7: #{tpu_custom_call.1} parent=1 // pred_check_branch
      %24 = sbr.rel (0) target = $region9
    $region8: #{tpu_custom_call.1} parent=1 // pred_region
      %s26 = ssub.s32 12288, 12288
      %27 = vsyncadd [#allocation6], %s26
      %s28 = sshll.u32 [#allocation5], 4
      %s29 = int_to_ptr.vmem [resolvable:$true] %s28
      %34 = dma.hbm_to_vmem [thread:$0]  %s1, 12288, %s29, [#allocation6], 128, 128, 8
    $region9: #{tpu_custom_call.1} parent=1 // pred_fallthru
      _
    // Predicated region
    $region10: #{tpu_custom_call.1} parent=1 // pred_check
      _
    $region11: #{tpu_custom_call.1} parent=1 // pred_check_branch
      %36 = sbr.rel (0) target = $region13
    $region12: #{tpu_custom_call.1} parent=1 // pred_region
      _
    $region13: #{tpu_custom_call.1} parent=1 // pred_fallthru
      _
    // Predicated region
    $region14: #{tpu_custom_call.1} parent=1 // pred_check
      _
    $region15: #{tpu_custom_call.1} parent=1 // pred_check_branch
      %38 = sbr.rel (0) target = $region17
    $region16: #{tpu_custom_call.1} parent=1 // pred_region
      %s40 = ssub.s32 2048, 2048
      %41 = vsyncadd [#allocation6], %s40
      %s42 = sshll.u32 [#allocation7], 4
      %s43 = int_to_ptr.vmem [resolvable:$true] %s42
      %48 = dma.hbm_to_vmem [thread:$0]  %s3, 2048, %s43, [#allocation6], 128, 128, 8
    $region17: #{tpu_custom_call.1} parent=1 // pred_fallthru
      _
    // Predicated region
    $region18: #{tpu_custom_call.1} parent=1 // pred_check
      _
    $region19: #{tpu_custom_call.1} parent=1 // pred_check_branch
      %50 = sbr.rel (0) target = $region21
    $region20: #{tpu_custom_call.1} parent=1 // pred_region
      _
    $region21: #{tpu_custom_call.1} parent=1 // pred_fallthru
      _
    // Predicated region
    $region22: #{tpu_custom_call.1} parent=1 // pred_check
      _
    $region23: #{tpu_custom_call.1} parent=1 // pred_check_branch
      %52 = sbr.rel (0) target = $region25
    $region24: #{tpu_custom_call.1} parent=1 // pred_region
      %53 = dma.done [#allocation3], 768
    $region25: #{tpu_custom_call.1} parent=1 // pred_fallthru
      _
    // Predicated region
    $region26: #{tpu_custom_call.1} parent=1 // pred_check
      _
    $region27: #{tpu_custom_call.1} parent=1 // pred_check_branch
      %55 = sbr.rel (0) target = $region29
    $region28: #{tpu_custom_call.1} parent=1 // pred_region
      %56 = dma.done [#allocation6], 12288
    $region29: #{tpu_custom_call.1} parent=1 // pred_fallthru
      _
    // Predicated region
    $region30: #{tpu_custom_call.1} parent=1 // pred_check
      _
    $region31: #{tpu_custom_call.1} parent=1 // pred_check_branch
      %58 = sbr.rel (0) target = $region33
    $region32: #{tpu_custom_call.1} parent=1 // pred_region
      %59 = dma.done [#allocation6], 2048
    $region33: #{tpu_custom_call.1} parent=1 // pred_fallthru
      _
    %v60 = vld [vmem:[#allocation2] sm:$0xff]
    %v61 = vld [vmem:[#allocation2 + $0x8] sm:$0xff]
    %v62 = vld [vmem:[#allocation2 + $0x10] sm:$0xff]
    %v63 = vld [vmem:[#allocation2 + $0x18] sm:$0xff]
    %v64 = vld [vmem:[#allocation2 + $0x20] sm:$0xff]
    %v65 = vld [vmem:[#allocation2 + $0x28] sm:$0xff]
    %v66 = vld [vmem:[#allocation5] sm:$0xff]
    %v67 = vld [vmem:[#allocation5 + $0x8] sm:$0xff]
    %v68 = vld [vmem:[#allocation5 + $0x10] sm:$0xff]
    %v69 = vld [vmem:[#allocation5 + $0x18] sm:$0xff]
    %v70 = vld [vmem:[#allocation5 + $0x20] sm:$0xff]
    %v71 = vld [vmem:[#allocation5 + $0x28] sm:$0xff]
    %v72 = vld [vmem:[#allocation5 + $0x30] sm:$0xff]
    %v73 = vld [vmem:[#allocation5 + $0x38] sm:$0xff]
    %v74 = vld [vmem:[#allocation5 + $0x40] sm:$0xff]
    %v75 = vld [vmem:[#allocation5 + $0x48] sm:$0xff]
    %v76 = vld [vmem:[#allocation5 + $0x50] sm:$0xff]
    %v77 = vld [vmem:[#allocation5 + $0x58] sm:$0xff]
    %v78 = vld [vmem:[#allocation5 + $0x60] sm:$0xff]
    %v79 = vld [vmem:[#allocation5 + $0x68] sm:$0xff]
    %v80 = vld [vmem:[#allocation5 + $0x70] sm:$0xff]
    %v81 = vld [vmem:[#allocation5 + $0x78] sm:$0xff]
    %v82 = vld [vmem:[#allocation5 + $0x80] sm:$0xff]
    %v83 = vld [vmem:[#allocation5 + $0x88] sm:$0xff]
    %v84 = vld [vmem:[#allocation5 + $0x90] sm:$0xff]
    %v85 = vld [vmem:[#allocation5 + $0x98] sm:$0xff]
    %v86 = vld [vmem:[#allocation5 + $0xa0] sm:$0xff]
    %v87 = vld [vmem:[#allocation5 + $0xa8] sm:$0xff]
    %v88 = vld [vmem:[#allocation5 + $0xb0] sm:$0xff]
    %v89 = vld [vmem:[#allocation5 + $0xb8] sm:$0xff]
    %v90 = vld [vmem:[#allocation5 + $0xc0] sm:$0xff]
    %v91 = vld [vmem:[#allocation5 + $0xc8] sm:$0xff]
    %v92 = vld [vmem:[#allocation5 + $0xd0] sm:$0xff]
    %v93 = vld [vmem:[#allocation5 + $0xd8] sm:$0xff]
    %v94 = vld [vmem:[#allocation5 + $0xe0] sm:$0xff]
    %v95 = vld [vmem:[#allocation5 + $0xe8] sm:$0xff]
    %v96 = vld [vmem:[#allocation5 + $0xf0] sm:$0xff]
    %v97 = vld [vmem:[#allocation5 + $0xf8] sm:$0xff]
    %v98 = vld [vmem:[#allocation5 + $0x100] sm:$0xff]
    %v99 = vld [vmem:[#allocation5 + $0x108] sm:$0xff]
    %v100 = vld [vmem:[#allocation5 + $0x110] sm:$0xff]
    %v101 = vld [vmem:[#allocation5 + $0x118] sm:$0xff]
    %v102 = vld [vmem:[#allocation5 + $0x120] sm:$0xff]
    %v103 = vld [vmem:[#allocation5 + $0x128] sm:$0xff]
    %v104 = vld [vmem:[#allocation5 + $0x130] sm:$0xff]
    %v105 = vld [vmem:[#allocation5 + $0x138] sm:$0xff]
    %v106 = vld [vmem:[#allocation5 + $0x140] sm:$0xff]
    %v107 = vld [vmem:[#allocation5 + $0x148] sm:$0xff]
    %v108 = vld [vmem:[#allocation5 + $0x150] sm:$0xff]
    %v109 = vld [vmem:[#allocation5 + $0x158] sm:$0xff]
    %v110 = vld [vmem:[#allocation5 + $0x160] sm:$0xff]
    %v111 = vld [vmem:[#allocation5 + $0x168] sm:$0xff]
    %v112 = vld [vmem:[#allocation5 + $0x170] sm:$0xff]
    %v113 = vld [vmem:[#allocation5 + $0x178] sm:$0xff]
    %v114 = vld [vmem:[#allocation5 + $0x180] sm:$0xff]
    %v115 = vld [vmem:[#allocation5 + $0x188] sm:$0xff]
    %v116 = vld [vmem:[#allocation5 + $0x190] sm:$0xff]
    %v117 = vld [vmem:[#allocation5 + $0x198] sm:$0xff]
    %v118 = vld [vmem:[#allocation5 + $0x1a0] sm:$0xff]
    %v119 = vld [vmem:[#allocation5 + $0x1a8] sm:$0xff]
    %v120 = vld [vmem:[#allocation5 + $0x1b0] sm:$0xff]
    %v121 = vld [vmem:[#allocation5 + $0x1b8] sm:$0xff]
    %v122 = vld [vmem:[#allocation5 + $0x1c0] sm:$0xff]
    %v123 = vld [vmem:[#allocation5 + $0x1c8] sm:$0xff]
    %v124 = vld [vmem:[#allocation5 + $0x1d0] sm:$0xff]
    %v125 = vld [vmem:[#allocation5 + $0x1d8] sm:$0xff]
    %v126 = vld [vmem:[#allocation5 + $0x1e0] sm:$0xff]
    %v127 = vld [vmem:[#allocation5 + $0x1e8] sm:$0xff]
    %v128 = vld [vmem:[#allocation5 + $0x1f0] sm:$0xff]
    %v129 = vld [vmem:[#allocation5 + $0x1f8] sm:$0xff]
    %v130 = vld [vmem:[#allocation5 + $0x200] sm:$0xff]
    %v131 = vld [vmem:[#allocation5 + $0x208] sm:$0xff]
    %v132 = vld [vmem:[#allocation5 + $0x210] sm:$0xff]
    %v133 = vld [vmem:[#allocation5 + $0x218] sm:$0xff]
    %v134 = vld [vmem:[#allocation5 + $0x220] sm:$0xff]
    %v135 = vld [vmem:[#allocation5 + $0x228] sm:$0xff]
    %v136 = vld [vmem:[#allocation5 + $0x230] sm:$0xff]
    %v137 = vld [vmem:[#allocation5 + $0x238] sm:$0xff]
    %v138 = vld [vmem:[#allocation5 + $0x240] sm:$0xff]
    %v139 = vld [vmem:[#allocation5 + $0x248] sm:$0xff]
    %v140 = vld [vmem:[#allocation5 + $0x250] sm:$0xff]
    %v141 = vld [vmem:[#allocation5 + $0x258] sm:$0xff]
    %v142 = vld [vmem:[#allocation5 + $0x260] sm:$0xff]
    %v143 = vld [vmem:[#allocation5 + $0x268] sm:$0xff]
    %v144 = vld [vmem:[#allocation5 + $0x270] sm:$0xff]
    %v145 = vld [vmem:[#allocation5 + $0x278] sm:$0xff]
    %v146 = vld [vmem:[#allocation5 + $0x280] sm:$0xff]
    %v147 = vld [vmem:[#allocation5 + $0x288] sm:$0xff]
    %v148 = vld [vmem:[#allocation5 + $0x290] sm:$0xff]
    %v149 = vld [vmem:[#allocation5 + $0x298] sm:$0xff]
    %v150 = vld [vmem:[#allocation5 + $0x2a0] sm:$0xff]
    %v151 = vld [vmem:[#allocation5 + $0x2a8] sm:$0xff]
    %v152 = vld [vmem:[#allocation5 + $0x2b0] sm:$0xff]
    %v153 = vld [vmem:[#allocation5 + $0x2b8] sm:$0xff]
    %v154 = vld [vmem:[#allocation5 + $0x2c0] sm:$0xff]
    %v155 = vld [vmem:[#allocation5 + $0x2c8] sm:$0xff]
    %v156 = vld [vmem:[#allocation5 + $0x2d0] sm:$0xff]
    %v157 = vld [vmem:[#allocation5 + $0x2d8] sm:$0xff]
    %v158 = vld [vmem:[#allocation5 + $0x2e0] sm:$0xff]
    %v159 = vld [vmem:[#allocation5 + $0x2e8] sm:$0xff]
    %v160 = vld [vmem:[#allocation5 + $0x2f0] sm:$0xff]
    %v161 = vld [vmem:[#allocation5 + $0x2f8] sm:$0xff]
    %v162 = vld [vmem:[%s2] sm:$0x1]
    %v164 = vlaneseq
    %v165 = vshrl.u32 %v164, 7
    %v166 = vsub.s32 0, %v165
    %v167 = vrot.slane %v162, %v166
    %169 = vmatprep.subr.mxu0 0.0
    %170 = vmatpush1.msra.mxu0 %v66
    %171 = vmatprep.subr.mxu0 0.0
    %172 = vmatpush1.msra.mxu0 %v67
    %173 = vmatprep.subr.mxu0 0.0
    %174 = vmatpush1.msra.mxu0 %v68
    %175 = vmatprep.subr.mxu0 0.0
    %176 = vmatpush1.msra.mxu0 %v69
    %177 = vmatprep.subr.mxu0 0.0
    %178 = vmatpush1.msra.mxu0 %v70
    %179 = vmatprep.subr.mxu0 0.0
    %180 = vmatpush1.msra.mxu0 %v71
    %181 = vmatprep.subr.mxu0 0.0
    %182 = vmatpush1.msra.mxu0 %v72
    %183 = vmatprep.subr.mxu0 0.0
    %184 = vmatpush1.msra.mxu0 %v73
    %185 = vmatprep.subr.mxu0 0.0
    %186 = vmatpush1.msra.mxu0 %v74
    %187 = vmatprep.subr.mxu0 0.0
    %188 = vmatpush1.msra.mxu0 %v75
    %189 = vmatprep.subr.mxu0 0.0
    %190 = vmatpush1.msra.mxu0 %v76
    %191 = vmatprep.subr.mxu0 0.0
    %192 = vmatpush1.msra.mxu0 %v77
    %193 = vmatprep.subr.mxu0 0.0
    %194 = vmatpush1.msra.mxu0 %v78
    %195 = vmatprep.subr.mxu0 0.0
    %196 = vmatpush1.msra.mxu0 %v79
    %197 = vmatprep.subr.mxu0 0.0
    %198 = vmatpush1.msra.mxu0 %v80
    %199 = vmatprep.subr.mxu0 0.0
    %200 = vmatpush1.msra.mxu0 %v81
    %201 = vmatprep.subr.mxu0 0.0
    %202 = vmatpush1.msra.mxu0 %v82
    %203 = vmatprep.subr.mxu0 0.0
    %204 = vmatpush1.msra.mxu0 %v83
    %205 = vmatprep.subr.mxu0 0.0
    %206 = vmatpush1.msra.mxu0 %v84
    %207 = vmatprep.subr.mxu0 0.0
    %208 = vmatpush1.msra.mxu0 %v85
    %209 = vmatprep.subr.mxu0 0.0
    %210 = vmatpush1.msra.mxu0 %v86
    %211 = vmatprep.subr.mxu0 0.0
    %212 = vmatpush1.msra.mxu0 %v87
    %213 = vmatprep.subr.mxu0 0.0
    %214 = vmatpush1.msra.mxu0 %v88
    %215 = vmatprep.subr.mxu0 0.0
    %216 = vmatpush1.msra.mxu0 %v89
    %217 = vmatprep.subr.mxu0 0.0
    %218 = vmatpush1.msra.mxu0 %v90
    %219 = vmatprep.subr.mxu0 0.0
    %220 = vmatpush1.msra.mxu0 %v91
    %221 = vmatprep.subr.mxu0 0.0
    %222 = vmatpush1.msra.mxu0 %v92
    %223 = vmatprep.subr.mxu0 0.0
    %224 = vmatpush1.msra.mxu0 %v93
    %225 = vmatprep.subr.mxu0 0.0
    %226 = vmatpush1.msra.mxu0 %v94
    %227 = vmatprep.subr.mxu0 0.0
    %228 = vmatpush1.msra.mxu0 %v95
    %229 = vmatprep.subr.mxu0 0.0
    %230 = vmatpush1.msra.mxu0 %v96
    %231 = vmatprep.subr.mxu0 0.0
    %232 = vmatpush1.msra.mxu0 %v97
    %233 = vmatprep.mubr.f32.mxu0 %v61
    %234 = vmatmul.mubr.f32.gmra.mrb[0].mxu0 %v60
    %v235 = vpop.f32.mrb[0].mxu0
    %v236 = vadd.f32 %v167, %v235
    %v237 = vpop.f32.mrb[0].mxu0
    %238 = vdwg.mxu0
    %239 = vmatprep.subr.mxu0 0.0
    %240 = vmatpush1.msra.mxu0 %v98
    %241 = vmatprep.subr.mxu0 0.0
    %242 = vmatpush1.msra.mxu0 %v99
    %243 = vmatprep.subr.mxu0 0.0
    %244 = vmatpush1.msra.mxu0 %v100
    %245 = vmatprep.subr.mxu0 0.0
    %246 = vmatpush1.msra.mxu0 %v101
    %247 = vmatprep.subr.mxu0 0.0
    %248 = vmatpush1.msra.mxu0 %v102
    %249 = vmatprep.subr.mxu0 0.0
    %250 = vmatpush1.msra.mxu0 %v103
    %251 = vmatprep.subr.mxu0 0.0
    %252 = vmatpush1.msra.mxu0 %v104
    %253 = vmatprep.subr.mxu0 0.0
    %254 = vmatpush1.msra.mxu0 %v105
    %255 = vmatprep.subr.mxu0 0.0
    %256 = vmatpush1.msra.mxu0 %v106
    %257 = vmatprep.subr.mxu0 0.0
    %258 = vmatpush1.msra.mxu0 %v107
    %259 = vmatprep.subr.mxu0 0.0
    %260 = vmatpush1.msra.mxu0 %v108
    %261 = vmatprep.subr.mxu0 0.0
    %262 = vmatpush1.msra.mxu0 %v109
    %263 = vmatprep.subr.mxu0 0.0
    %264 = vmatpush1.msra.mxu0 %v110
    %265 = vmatprep.subr.mxu0 0.0
    %266 = vmatpush1.msra.mxu0 %v111
    %267 = vmatprep.subr.mxu0 0.0
    %268 = vmatpush1.msra.mxu0 %v112
    %269 = vmatprep.subr.mxu0 0.0
    %270 = vmatpush1.msra.mxu0 %v113
    %271 = vmatprep.subr.mxu0 0.0
    %272 = vmatpush1.msra.mxu0 %v114
    %273 = vmatprep.subr.mxu0 0.0
    %274 = vmatpush1.msra.mxu0 %v115
    %275 = vmatprep.subr.mxu0 0.0
    %276 = vmatpush1.msra.mxu0 %v116
    %277 = vmatprep.subr.mxu0 0.0
    %278 = vmatpush1.msra.mxu0 %v117
    %279 = vmatprep.subr.mxu0 0.0
    %280 = vmatpush1.msra.mxu0 %v118
    %281 = vmatprep.subr.mxu0 0.0
    %282 = vmatpush1.msra.mxu0 %v119
    %283 = vmatprep.subr.mxu0 0.0
    %284 = vmatpush1.msra.mxu0 %v120
    %285 = vmatprep.subr.mxu0 0.0
    %286 = vmatpush1.msra.mxu0 %v121
    %287 = vmatprep.subr.mxu0 0.0
    %288 = vmatpush1.msra.mxu0 %v122
    %289 = vmatprep.subr.mxu0 0.0
    %290 = vmatpush1.msra.mxu0 %v123
    %291 = vmatprep.subr.mxu0 0.0
    %292 = vmatpush1.msra.mxu0 %v124
    %293 = vmatprep.subr.mxu0 0.0
    %294 = vmatpush1.msra.mxu0 %v125
    %295 = vmatprep.subr.mxu0 0.0
    %296 = vmatpush1.msra.mxu0 %v126
    %297 = vmatprep.subr.mxu0 0.0
    %298 = vmatpush1.msra.mxu0 %v127
    %299 = vmatprep.subr.mxu0 0.0
    %300 = vmatpush1.msra.mxu0 %v128
    %301 = vmatprep.subr.mxu0 0.0
    %302 = vmatpush1.msra.mxu0 %v129
    %303 = vmatprep.mubr.f32.mxu0 %v63
    %304 = vmatmul.mubr.f32.gmra.mrb[0].mxu0 %v62
    %v305 = vpop.f32.mrb[0].mxu0
    %v306 = vadd.f32 %v236, %v305
    %v307 = vpop.f32.mrb[0].mxu0
    %308 = vdwg.mxu0
    %309 = vmatprep.subr.mxu0 0.0
    %310 = vmatpush1.msra.mxu0 %v130
    %311 = vmatprep.subr.mxu0 0.0
    %312 = vmatpush1.msra.mxu0 %v131
    %313 = vmatprep.subr.mxu0 0.0
    %314 = vmatpush1.msra.mxu0 %v132
    %315 = vmatprep.subr.mxu0 0.0
    %316 = vmatpush1.msra.mxu0 %v133
    %317 = vmatprep.subr.mxu0 0.0
    %318 = vmatpush1.msra.mxu0 %v134
    %319 = vmatprep.subr.mxu0 0.0
    %320 = vmatpush1.msra.mxu0 %v135
    %321 = vmatprep.subr.mxu0 0.0
    %322 = vmatpush1.msra.mxu0 %v136
    %323 = vmatprep.subr.mxu0 0.0
    %324 = vmatpush1.msra.mxu0 %v137
    %325 = vmatprep.subr.mxu0 0.0
    %326 = vmatpush1.msra.mxu0 %v138
    %327 = vmatprep.subr.mxu0 0.0
    %328 = vmatpush1.msra.mxu0 %v139
    %329 = vmatprep.subr.mxu0 0.0
    %330 = vmatpush1.msra.mxu0 %v140
    %331 = vmatprep.subr.mxu0 0.0
    %332 = vmatpush1.msra.mxu0 %v141
    %333 = vmatprep.subr.mxu0 0.0
    %334 = vmatpush1.msra.mxu0 %v142
    %335 = vmatprep.subr.mxu0 0.0
    %336 = vmatpush1.msra.mxu0 %v143
    %337 = vmatprep.subr.mxu0 0.0
    %338 = vmatpush1.msra.mxu0 %v144
    %339 = vmatprep.subr.mxu0 0.0
    %340 = vmatpush1.msra.mxu0 %v145
    %341 = vmatprep.subr.mxu0 0.0
    %342 = vmatpush1.msra.mxu0 %v146
    %343 = vmatprep.subr.mxu0 0.0
    %344 = vmatpush1.msra.mxu0 %v147
    %345 = vmatprep.subr.mxu0 0.0
    %346 = vmatpush1.msra.mxu0 %v148
    %347 = vmatprep.subr.mxu0 0.0
    %348 = vmatpush1.msra.mxu0 %v149
    %349 = vmatprep.subr.mxu0 0.0
    %350 = vmatpush1.msra.mxu0 %v150
    %351 = vmatprep.subr.mxu0 0.0
    %352 = vmatpush1.msra.mxu0 %v151
    %353 = vmatprep.subr.mxu0 0.0
    %354 = vmatpush1.msra.mxu0 %v152
    %355 = vmatprep.subr.mxu0 0.0
    %356 = vmatpush1.msra.mxu0 %v153
    %357 = vmatprep.subr.mxu0 0.0
    %358 = vmatpush1.msra.mxu0 %v154
    %359 = vmatprep.subr.mxu0 0.0
    %360 = vmatpush1.msra.mxu0 %v155
    %361 = vmatprep.subr.mxu0 0.0
    %362 = vmatpush1.msra.mxu0 %v156
    %363 = vmatprep.subr.mxu0 0.0
    %364 = vmatpush1.msra.mxu0 %v157
    %365 = vmatprep.subr.mxu0 0.0
    %366 = vmatpush1.msra.mxu0 %v158
    %367 = vmatprep.subr.mxu0 0.0
    %368 = vmatpush1.msra.mxu0 %v159
    %369 = vmatprep.subr.mxu0 0.0
    %370 = vmatpush1.msra.mxu0 %v160
    %371 = vmatprep.subr.mxu0 0.0
    %372 = vmatpush1.msra.mxu0 %v161
    %373 = vmatprep.mubr.f32.mxu0 %v65
    %374 = vmatmul.mubr.f32.gmra.mrb[0].mxu0 %v64
    %v375 = vpop.f32.mrb[0].mxu0
    %v376 = vadd.f32 %v306, %v375
    %v377 = vpop.f32.mrb[0].mxu0
    %378 = vdwg.mxu0
    %v379 = vmax.f32 %v376, 0.0
    %v380 = vld [vmem:[#allocation7] sm:$0xff]
    %v381 = vld [vmem:[#allocation7 + $0x8] sm:$0xff]
    %v382 = vld [vmem:[#allocation7 + $0x10] sm:$0xff]
    %v383 = vld [vmem:[#allocation7 + $0x18] sm:$0xff]
    %v384 = vld [vmem:[#allocation7 + $0x20] sm:$0xff]
    %v385 = vld [vmem:[#allocation7 + $0x28] sm:$0xff]
    %v386 = vld [vmem:[#allocation7 + $0x30] sm:$0xff]
    %v387 = vld [vmem:[#allocation7 + $0x38] sm:$0xff]
    %v388 = vld [vmem:[#allocation7 + $0x40] sm:$0xff]
    %v389 = vld [vmem:[#allocation7 + $0x48] sm:$0xff]
    %v390 = vld [vmem:[#allocation7 + $0x50] sm:$0xff]
    %v391 = vld [vmem:[#allocation7 + $0x58] sm:$0xff]
    %v392 = vld [vmem:[#allocation7 + $0x60] sm:$0xff]
    %v393 = vld [vmem:[#allocation7 + $0x68] sm:$0xff]
    %v394 = vld [vmem:[#allocation7 + $0x70] sm:$0xff]
    %v395 = vld [vmem:[#allocation7 + $0x78] sm:$0xff]
    %v396 = vld [vmem:[%s4] sm:$0x1]
    %v398 = vlaneseq
    %v399 = vshrl.u32 %v398, 7
    %v400 = vsub.s32 0, %v399
    %v401 = vrot.slane %v396, %v400
    %403 = vmatprep.subr.mxu0 0.0
    %404 = vmatpush1.msra.mxu0 %v380
    %405 = vmatprep.subr.mxu0 0.0
    %406 = vmatpush1.msra.mxu0 %v381
    %407 = vmatprep.subr.mxu0 0.0
    %408 = vmatpush1.msra.mxu0 %v382
    %409 = vmatprep.subr.mxu0 0.0
    %410 = vmatpush1.msra.mxu0 %v383
    %411 = vmatprep.subr.mxu0 0.0
    %412 = vmatpush1.msra.mxu0 %v384
    %413 = vmatprep.subr.mxu0 0.0
    %414 = vmatpush1.msra.mxu0 %v385
    %415 = vmatprep.subr.mxu0 0.0
    %416 = vmatpush1.msra.mxu0 %v386
    %417 = vmatprep.subr.mxu0 0.0
    %418 = vmatpush1.msra.mxu0 %v387
    %419 = vmatprep.subr.mxu0 0.0
    %420 = vmatpush1.msra.mxu0 %v388
    %421 = vmatprep.subr.mxu0 0.0
    %422 = vmatpush1.msra.mxu0 %v389
    %423 = vmatprep.subr.mxu0 0.0
    %424 = vmatpush1.msra.mxu0 %v390
    %425 = vmatprep.subr.mxu0 0.0
    %426 = vmatpush1.msra.mxu0 %v391
    %427 = vmatprep.subr.mxu0 0.0
    %428 = vmatpush1.msra.mxu0 %v392
    %429 = vmatprep.subr.mxu0 0.0
    %430 = vmatpush1.msra.mxu0 %v393
    %431 = vmatprep.subr.mxu0 0.0
    %432 = vmatpush1.msra.mxu0 %v394
    %433 = vmatprep.subr.mxu0 0.0
    %434 = vmatpush1.msra.mxu0 %v395
    %435 = vmatprep.subr.mxu0 0.0
    %436 = vmatpush1.msra.mxu0 0.0
    %437 = vmatprep.subr.mxu0 0.0
    %438 = vmatpush1.msra.mxu0 0.0
    %439 = vmatprep.subr.mxu0 0.0
    %440 = vmatpush1.msra.mxu0 0.0
    %441 = vmatprep.subr.mxu0 0.0
    %442 = vmatpush1.msra.mxu0 0.0
    %443 = vmatprep.subr.mxu0 0.0
    %444 = vmatpush1.msra.mxu0 0.0
    %445 = vmatprep.subr.mxu0 0.0
    %446 = vmatpush1.msra.mxu0 0.0
    %447 = vmatprep.subr.mxu0 0.0
    %448 = vmatpush1.msra.mxu0 0.0
    %449 = vmatprep.subr.mxu0 0.0
    %450 = vmatpush1.msra.mxu0 0.0
    %451 = vmatprep.subr.mxu0 0.0
    %452 = vmatpush1.msra.mxu0 0.0
    %453 = vmatprep.subr.mxu0 0.0
    %454 = vmatpush1.msra.mxu0 0.0
    %455 = vmatprep.subr.mxu0 0.0
    %456 = vmatpush1.msra.mxu0 0.0
    %457 = vmatprep.subr.mxu0 0.0
    %458 = vmatpush1.msra.mxu0 0.0
    %459 = vmatprep.subr.mxu0 0.0
    %460 = vmatpush1.msra.mxu0 0.0
    %461 = vmatprep.subr.mxu0 0.0
    %462 = vmatpush1.msra.mxu0 0.0
    %463 = vmatprep.subr.mxu0 0.0
    %464 = vmatpush1.msra.mxu0 0.0
    %465 = vmatprep.subr.mxu0 0.0
    %466 = vmatpush1.msra.mxu0 0.0
    %467 = vmatprep.mubr.f32.mxu0 0.0
    %468 = vmatmul.mubr.f32.gmra.mrb[0].mxu0 %v379
    %v469 = vpop.f32.mrb[0].mxu0
    %v470 = vadd.f32 %v401, %v469
    %v471 = vpop.f32.mrb[0].mxu0
    %472 = vdwg.mxu0
    %473 = vst [vmem:[#allocation8] sm:$0xff] %v470
    // Predicated region
    $region34: #{tpu_custom_call.1} parent=1 // pred_check
      _
    $region35: #{tpu_custom_call.1} parent=1 // pred_check_branch
      %475 = sbr.rel (0) target = $region37
    $region36: #{tpu_custom_call.1} parent=1 // pred_region
      %s477 = ssub.s32 128, 128
      %478 = vsyncadd [#allocation4], %s477
      %s480 = sshll.u32 [#allocation8], 4
      %s481 = int_to_ptr.vmem [resolvable:$true] %s480
      %483 = dma.vmem_to_hbm [thread:$0]  %s481, 128, %s5, [#allocation4]
    $region37: #{tpu_custom_call.1} parent=1 // pred_fallthru
      _
    // Predicated region
    $region38: #{tpu_custom_call.1} parent=1 // pred_check
      _
    $region39: #{tpu_custom_call.1} parent=1 // pred_check_branch
      %485 = sbr.rel (0) target = $region41
    $region40: #{tpu_custom_call.1} parent=1 // pred_region
      %486 = dma.done [#allocation4], 128
    $region41: #{tpu_custom_call.1} parent=1 // pred_fallthru
      _
    %487 = vsyncpa [#allocation3], 1
    %488 = vsyncpa [#allocation6], 1
    %489 = vsyncpa [#allocation4], 1

</llo_original>
